<compile_context>
chip_gen: v7x
topology: tpu7x:2x2x1
jax: 0.10.0
libtpu: 0.0.40
codegen_flags: <defaults>
</compile_context>

<pallas_src>
import functools

import jax
import jax.numpy as jnp
from jax.experimental import pallas as pl
from jax.experimental.pallas import tpu as pltpu

LOG_STD_MIN = -20.0
LOG_STD_MAX = 2.0


def _round_up(x, m):
    return ((x + m - 1) // m) * m


def actor_kernel(x_ref, w1_ref, b1_ref, w2_ref, b2_ref, wh_ref, bh_ref,
                 lo_ref, hi_ref, out_ref, *, n_out):
    cd = w1_ref.dtype
    # In-kernel cast of the f32 input to the MXU compute dtype (no-op for f32).
    x = x_ref[...].astype(cd)
    # fc1 + ReLU  (bf16/f32 MXU inputs, f32 accumulate, f32 elementwise)
    h1 = jnp.dot(x, w1_ref[...], preferred_element_type=jnp.float32) + b1_ref[...]
    h1 = jnp.maximum(h1, 0.0)
    # fc2 + ReLU
    h2 = jnp.dot(h1.astype(cd), w2_ref[...],
                 preferred_element_type=jnp.float32) + b2_ref[...]
    h2 = jnp.maximum(h2, 0.0)
    # fused mu / log_std head: one lane-dense matmul [TB, n_pad]
    heads = jnp.dot(h2.astype(cd), wh_ref[...],
                    preferred_element_type=jnp.float32) + bh_ref[...]
    # per-column clamp via precomputed bound rows:
    #   mu cols: (-inf, +inf) pass-through; log_std cols: [LOG_STD_MIN, LOG_STD_MAX]
    heads = jnp.minimum(jnp.maximum(heads, lo_ref[...]), hi_ref[...])
    # store only the real 2*A columns (narrow output -> ~16x less writeback)
    out_ref[...] = heads[:, :n_out].astype(out_ref.dtype)


def pack_actor_params(params, compute_dtype=jnp.bfloat16):
    """One-time packing: fuse & lane-pad the two heads, cast weights for the MXU,
    and precompute per-column clamp bounds.

    Weights are [in_features, out_features] (transposed vs torch). Biases stay f32.
    """
    H = params["w1"].shape[1]
    A = params["wmu"].shape[1]
    n_pad = _round_up(max(2 * A, 128), 128)   # lane-dense MXU operand width

    w_heads = jnp.zeros((H, n_pad), jnp.float32)
    w_heads = w_heads.at[:, :A].set(params["wmu"]).at[:, A:2 * A].set(params["wls"])
    b_heads = jnp.zeros((1, n_pad), jnp.float32)
    b_heads = b_heads.at[:, :A].set(params["bmu"]).at[:, A:2 * A].set(params["bls"])

    col = jnp.arange(n_pad)
    is_ls = (col >= A) & (col < 2 * A)
    lo = jnp.where(is_ls, LOG_STD_MIN, -jnp.inf).astype(jnp.float32).reshape(1, n_pad)
    hi = jnp.where(is_ls, LOG_STD_MAX, jnp.inf).astype(jnp.float32).reshape(1, n_pad)

    return {
        "w1": params["w1"].astype(compute_dtype),
        "b1": params["b1"].astype(jnp.float32),
        "w2": params["w2"].astype(compute_dtype),
        "b2": params["b2"].astype(jnp.float32),
        "wh": w_heads.astype(compute_dtype),
        "bh": b_heads,
        "lo": lo,
        "hi": hi,
        "action_size": A,
    }


def actor_forward(state, packed, *, block_b=2048):
    """state: [B, state_size] f32 (passed through untouched). packed: pack_actor_params()."""
    B, S = state.shape
    H = packed["w1"].shape[1]
    n_pad = packed["wh"].shape[1]
    A = packed["action_size"]
    n_out = 2 * A

    # Balanced batch tiles: minimize padding, amortize grid-step overhead.
    n_tiles = max(1, pl.cdiv(B, block_b))
    # v7x megacore: make sure the "parallel" axis has >= 2 steps once a single
    # tile would be more than half full (so both TensorCores get work).
    if n_tiles == 1 and B > block_b // 2:
        n_tiles = 2
    TB = _round_up(-(-B // n_tiles), 8)     # ceil(B / n_tiles), sublane multiple
    B_pad = n_tiles * TB

    x = state
    if B_pad != B:
        x = jnp.pad(x, ((0, B_pad - B), (0, 0)))

    out = pl.pallas_call(
        functools.partial(actor_kernel, n_out=n_out),
        out_shape=jax.ShapeDtypeStruct((B_pad, n_out), jnp.float32),
        grid=(n_tiles,),
        in_specs=[
            pl.BlockSpec((TB, S), lambda i: (i, 0)),
            pl.BlockSpec((S, H), lambda i: (0, 0)),
            pl.BlockSpec((1, H), lambda i: (0, 0)),
            pl.BlockSpec((H, H), lambda i: (0, 0)),
            pl.BlockSpec((1, H), lambda i: (0, 0)),
            pl.BlockSpec((H, n_pad), lambda i: (0, 0)),
            pl.BlockSpec((1, n_pad), lambda i: (0, 0)),
            pl.BlockSpec((1, n_pad), lambda i: (0, 0)),
            pl.BlockSpec((1, n_pad), lambda i: (0, 0)),
        ],
        out_specs=pl.BlockSpec((TB, n_out), lambda i: (i, 0)),
        compiler_params=pltpu.CompilerParams(
            dimension_semantics=("parallel",)),
    )(x, packed["w1"], packed["b1"], packed["w2"], packed["b2"],
      packed["wh"], packed["bh"], packed["lo"], packed["hi"])

    mu = out[:B, :A]
    log_std = out[:B, A:n_out]
    return mu, log_std


def init_actor_params(key, state_size, action_size, hidden_size=32, init_w=0.003):
    """Synthetic init mirroring torch Linear default / reset_parameters.
    Weights stored as [in_features, out_features] (transposed vs torch)."""
    ks = jax.random.split(key, 8)

    def uniform(k, shape, lim):
        return jax.random.uniform(k, shape, jnp.float32, -lim, lim)

    lim1 = 1.0 / jnp.sqrt(jnp.float32(state_size))
    lim2 = 1.0 / jnp.sqrt(jnp.float32(hidden_size))
    return {
        "w1": uniform(ks[0], (state_size, hidden_size), lim1),
        "b1": uniform(ks[1], (1, hidden_size), lim1),
        "w2": uniform(ks[2], (hidden_size, hidden_size), lim2),
        "b2": uniform(ks[3], (1, hidden_size), lim2),
        "wmu": uniform(ks[4], (hidden_size, action_size), init_w),
        "bmu": uniform(ks[5], (1, action_size), lim2),
        "wls": uniform(ks[6], (hidden_size, action_size), init_w),
        "bls": uniform(ks[7], (1, action_size), lim2),
    }


def actor_forward_ref(state, params):
    """Pure-JAX reference."""
    h1 = jnp.maximum(state @ params["w1"] + params["b1"], 0.0)
    h2 = jnp.maximum(h1 @ params["w2"] + params["b2"], 0.0)
    mu = h2 @ params["wmu"] + params["bmu"]
    ls = jnp.clip(h2 @ params["wls"] + params["bls"], LOG_STD_MIN, LOG_STD_MAX)
    return mu, ls


if __name__ == "__main__":
    key = jax.random.PRNGKey(0)
    k_params, k_state, k_big, k_odd = jax.random.split(key, 4)

    batch = 8
    state_size = 8
    action_size = 4
    hidden_size = 32

    params = init_actor_params(k_params, state_size, action_size, hidden_size)
    state = jax.random.normal(k_state, (batch, state_size), jnp.float32)
    mu_ref, ls_ref = actor_forward_ref(state, params)

    # --- f32 path: strict numerical check ---
    packed_f32 = pack_actor_params(params, jnp.float32)
    mu, log_std = actor_forward(state, packed_f32)
    jax.block_until_ready((mu, log_std))
    assert mu.shape == (batch, action_size) and log_std.shape == (batch, action_size)
    assert jnp.allclose(mu, mu_ref, atol=1e-5), "mu mismatch (f32)"
    assert jnp.allclose(log_std, ls_ref, atol=1e-5), "log_std mismatch (f32)"

    # --- bf16 MXU-input path (default for v6e/v7x): loose check ---
    packed_bf16 = pack_actor_params(params, jnp.bfloat16)
    mu_b, ls_b = actor_forward(state, packed_bf16)
    jax.block_until_ready((mu_b, ls_b))
    assert jnp.allclose(mu_b, mu_ref, atol=5e-2), "mu mismatch (bf16)"
    assert jnp.allclose(ls_b, ls_ref, atol=5e-2), "log_std mismatch (bf16)"

    # --- batched path, exactly dividing: B=640, block_b=1024 -> 2 tiles x 320, no pad ---
    big_batch = 640
    state_big = jax.random.normal(k_big, (big_batch, state_size), jnp.float32)
    mu2, ls2 = actor_forward(state_big, packed_f32, block_b=1024)
    jax.block_until_ready((mu2, ls2))
    mu2_ref, ls2_ref = actor_forward_ref(state_big, params)
    assert mu2.shape == (big_batch, action_size)
    assert jnp.allclose(mu2, mu2_ref, atol=1e-5), "mu mismatch (big batch)"
    assert jnp.allclose(ls2, ls2_ref, atol=1e-5), "log_std mismatch (big batch)"

    # --- non-dividing batch exercising the remainder-pad path: B=300, block_b=128
    #     -> 3 tiles x 104, padded to 312 ---
    odd_batch = 300
    state_odd = jax.random.normal(k_odd, (odd_batch, state_size), jnp.float32)
    mu3, ls3 = actor_forward(state_odd, packed_f32, block_b=128)
    jax.block_until_ready((mu3, ls3))
    mu3_ref, ls3_ref = actor_forward_ref(state_odd, params)
    assert mu3.shape == (odd_batch, action_size)
    assert jnp.allclose(mu3, mu3_ref, atol=1e-5), "mu mismatch (odd batch)"
    assert jnp.allclose(ls3, ls3_ref, atol=1e-5), "log_std mismatch (odd batch)"

    print("KERNEL_OK")
</pallas_src>

<mosaic_0001>
module attributes {stable_mosaic.version = 11 : i64} {
  func.func @actor_kernel(%arg0: i32, %arg1: memref<8x8xf32, #tpu.memory_space<vmem>>, %arg2: memref<8x32xf32, #tpu.memory_space<vmem>>, %arg3: memref<1x32xf32, #tpu.memory_space<vmem>>, %arg4: memref<32x32xf32, #tpu.memory_space<vmem>>, %arg5: memref<1x32xf32, #tpu.memory_space<vmem>>, %arg6: memref<32x128xf32, #tpu.memory_space<vmem>>, %arg7: memref<1x128xf32, #tpu.memory_space<vmem>>, %arg8: memref<1x128xf32, #tpu.memory_space<vmem>>, %arg9: memref<1x128xf32, #tpu.memory_space<vmem>>, %arg10: memref<8x8xf32, #tpu.memory_space<vmem>>) attributes {dimension_semantics = [#tpu.dimension_semantics<parallel>], iteration_bounds = array<i64: 1>, scalar_prefetch = 0 : i64, scratch_operands = 0 : i64, tpu.core_type = #tpu.core_type<tc>, window_params = [{transform_indices = @transform_0, window_bounds = array<i64: 8, 8>}, {pipeline_mode = #tpu.pipeline_mode<synchronous>, transform_indices = @transform_1, window_bounds = array<i64: 8, 32>}, {pipeline_mode = #tpu.pipeline_mode<synchronous>, transform_indices = @transform_2, window_bounds = array<i64: 1, 32>}, {pipeline_mode = #tpu.pipeline_mode<synchronous>, transform_indices = @transform_3, window_bounds = array<i64: 32, 32>}, {pipeline_mode = #tpu.pipeline_mode<synchronous>, transform_indices = @transform_4, window_bounds = array<i64: 1, 32>}, {pipeline_mode = #tpu.pipeline_mode<synchronous>, transform_indices = @transform_5, window_bounds = array<i64: 32, 128>}, {pipeline_mode = #tpu.pipeline_mode<synchronous>, transform_indices = @transform_6, window_bounds = array<i64: 1, 128>}, {pipeline_mode = #tpu.pipeline_mode<synchronous>, transform_indices = @transform_7, window_bounds = array<i64: 1, 128>}, {pipeline_mode = #tpu.pipeline_mode<synchronous>, transform_indices = @transform_8, window_bounds = array<i64: 1, 128>}, {transform_indices = @transform_9, window_bounds = array<i64: 8, 8>}]} {
    %c0 = arith.constant 0 : index
    %c0_0 = arith.constant 0 : index
    %0 = vector.load %arg1[%c0, %c0_0] : memref<8x8xf32, #tpu.memory_space<vmem>>, vector<8x8xf32>
    %c0_1 = arith.constant 0 : index
    %c0_2 = arith.constant 0 : index
    %1 = vector.load %arg2[%c0_1, %c0_2] : memref<8x32xf32, #tpu.memory_space<vmem>>, vector<8x32xf32>
    %cst = arith.constant dense<0.000000e+00> : vector<8x32xf32>
    %2 = tpu.matmul %0, %1, %cst {dimension_numbers = #tpu.dot_dimension_numbers<[1], [0], [0], [1], [0, 0, 1, 1], [], []>} : vector<8x8xf32>, vector<8x32xf32>, vector<8x32xf32> -> vector<8x32xf32>
    %c0_3 = arith.constant 0 : index
    %c0_4 = arith.constant 0 : index
    %3 = vector.load %arg3[%c0_3, %c0_4] : memref<1x32xf32, #tpu.memory_space<vmem>>, vector<1x32xf32>
    %4 = vector.broadcast %3 : vector<1x32xf32> to vector<8x32xf32>
    %5 = arith.addf %2, %4 : vector<8x32xf32>
    %cst_5 = arith.constant 0.000000e+00 : f32
    %6 = vector.broadcast %cst_5 : f32 to vector<8x32xf32>
    %7 = arith.maximumf %5, %6 : vector<8x32xf32>
    %c0_6 = arith.constant 0 : index
    %c0_7 = arith.constant 0 : index
    %8 = vector.load %arg4[%c0_6, %c0_7] : memref<32x32xf32, #tpu.memory_space<vmem>>, vector<32x32xf32>
    %cst_8 = arith.constant dense<0.000000e+00> : vector<8x32xf32>
    %9 = tpu.matmul %7, %8, %cst_8 {dimension_numbers = #tpu.dot_dimension_numbers<[1], [0], [0], [1], [0, 0, 1, 1], [], []>} : vector<8x32xf32>, vector<32x32xf32>, vector<8x32xf32> -> vector<8x32xf32>
    %c0_9 = arith.constant 0 : index
    %c0_10 = arith.constant 0 : index
    %10 = vector.load %arg5[%c0_9, %c0_10] : memref<1x32xf32, #tpu.memory_space<vmem>>, vector<1x32xf32>
    %11 = vector.broadcast %10 : vector<1x32xf32> to vector<8x32xf32>
    %12 = arith.addf %9, %11 : vector<8x32xf32>
    %cst_11 = arith.constant 0.000000e+00 : f32
    %13 = vector.broadcast %cst_11 : f32 to vector<8x32xf32>
    %14 = arith.maximumf %12, %13 : vector<8x32xf32>
    %c0_12 = arith.constant 0 : index
    %c0_13 = arith.constant 0 : index
    %15 = vector.load %arg6[%c0_12, %c0_13] : memref<32x128xf32, #tpu.memory_space<vmem>>, vector<32x128xf32>
    %cst_14 = arith.constant dense<0.000000e+00> : vector<8x128xf32>
    %16 = tpu.matmul %14, %15, %cst_14 {dimension_numbers = #tpu.dot_dimension_numbers<[1], [0], [0], [1], [0, 0, 1, 1], [], []>} : vector<8x32xf32>, vector<32x128xf32>, vector<8x128xf32> -> vector<8x128xf32>
    %c0_15 = arith.constant 0 : index
    %c0_16 = arith.constant 0 : index
    %17 = vector.load %arg7[%c0_15, %c0_16] : memref<1x128xf32, #tpu.memory_space<vmem>>, vector<1x128xf32>
    %18 = vector.broadcast %17 : vector<1x128xf32> to vector<8x128xf32>
    %19 = arith.addf %16, %18 : vector<8x128xf32>
    %c0_17 = arith.constant 0 : index
    %c0_18 = arith.constant 0 : index
    %20 = vector.load %arg8[%c0_17, %c0_18] : memref<1x128xf32, #tpu.memory_space<vmem>>, vector<1x128xf32>
    %21 = vector.broadcast %20 : vector<1x128xf32> to vector<8x128xf32>
    %22 = arith.maximumf %19, %21 : vector<8x128xf32>
    %c0_19 = arith.constant 0 : index
    %c0_20 = arith.constant 0 : index
    %23 = vector.load %arg9[%c0_19, %c0_20] : memref<1x128xf32, #tpu.memory_space<vmem>>, vector<1x128xf32>
    %24 = vector.broadcast %23 : vector<1x128xf32> to vector<8x128xf32>
    %25 = arith.minimumf %22, %24 : vector<8x128xf32>
    %26 = vector.extract_strided_slice %25 {offsets = [0, 0], sizes = [8, 8], strides = [1, 1]} : vector<8x128xf32> to vector<8x8xf32>
    %c0_21 = arith.constant 0 : index
    %c0_22 = arith.constant 0 : index
    %27 = vector.load %arg10[%c0_21, %c0_22] : memref<8x8xf32, #tpu.memory_space<vmem>>, vector<8x8xf32>
    tpu.vector_store %arg10[%c0_21, %c0_22], %26 {strides = array<i32>} : memref<8x8xf32, #tpu.memory_space<vmem>>, vector<8x8xf32>,
    return
  }
  func.func @transform_0(%arg0: i32) -> (i32, i32) {
    %c0_i32 = arith.constant 0 : i32
    %c0_i32_0 = arith.constant 0 : i32
    return %arg0, %c0_i32 : i32, i32
  }
  func.func @transform_1(%arg0: i32) -> (i32, i32) {
    %c0_i32 = arith.constant 0 : i32
    %c0_i32_0 = arith.constant 0 : i32
    %c0_i32_1 = arith.constant 0 : i32
    return %c0_i32, %c0_i32_0 : i32, i32
  }
  func.func @transform_2(%arg0: i32) -> (i32, i32) {
    %c0_i32 = arith.constant 0 : i32
    %c0_i32_0 = arith.constant 0 : i32
    %c0_i32_1 = arith.constant 0 : i32
    return %c0_i32, %c0_i32_0 : i32, i32
  }
  func.func @transform_3(%arg0: i32) -> (i32, i32) {
    %c0_i32 = arith.constant 0 : i32
    %c0_i32_0 = arith.constant 0 : i32
    %c0_i32_1 = arith.constant 0 : i32
    return %c0_i32, %c0_i32_0 : i32, i32
  }
  func.func @transform_4(%arg0: i32) -> (i32, i32) {
    %c0_i32 = arith.constant 0 : i32
    %c0_i32_0 = arith.constant 0 : i32
    %c0_i32_1 = arith.constant 0 : i32
    return %c0_i32, %c0_i32_0 : i32, i32
  }
  func.func @transform_5(%arg0: i32) -> (i32, i32) {
    %c0_i32 = arith.constant 0 : i32
    %c0_i32_0 = arith.constant 0 : i32
    %c0_i32_1 = arith.constant 0 : i32
    return %c0_i32, %c0_i32_0 : i32, i32
  }
  func.func @transform_6(%arg0: i32) -> (i32, i32) {
    %c0_i32 = arith.constant 0 : i32
    %c0_i32_0 = arith.constant 0 : i32
    %c0_i32_1 = arith.constant 0 : i32
    return %c0_i32, %c0_i32_0 : i32, i32
  }
  func.func @transform_7(%arg0: i32) -> (i32, i32) {
    %c0_i32 = arith.constant 0 : i32
    %c0_i32_0 = arith.constant 0 : i32
    %c0_i32_1 = arith.constant 0 : i32
    return %c0_i32, %c0_i32_0 : i32, i32
  }
  func.func @transform_8(%arg0: i32) -> (i32, i32) {
    %c0_i32 = arith.constant 0 : i32
    %c0_i32_0 = arith.constant 0 : i32
    %c0_i32_1 = arith.constant 0 : i32
    return %c0_i32, %c0_i32_0 : i32, i32
  }
  func.func @transform_9(%arg0: i32) -> (i32, i32) {
    %c0_i32 = arith.constant 0 : i32
    %c0_i32_0 = arith.constant 0 : i32
    return %arg0, %c0_i32 : i32, i32
  }
}

</mosaic_0001>

<llo_original>
// kernel: tpu_custom_call.1
$region0: #{tpu_custom_call.1}
  #allocation0 [shape = 'u32[]', space=smem, size = 0x4, offset = 0x4, fixed_abs, tag = 'smem constant byte address 0x4 - core index']
  #allocation1 [shape = 'u32[144,128]{1,0:T(1,128)}', space=vmem, size = 0x12000, scoped, tag = 'internal scratch']
  %s0 = inlined_call_operand.hbm [shape: f32[8,8], index: 0, kind: input, shape index: {}]
  %s1 = inlined_call_operand.hbm [shape: f32[8,32], index: 1, kind: input, shape index: {}]
  %s2 = inlined_call_operand.vmem [shape: f32[1,32], index: 2, kind: input, shape index: {}]
  %s3 = inlined_call_operand.hbm [shape: f32[32,32], index: 3, kind: input, shape index: {}]
  %s4 = inlined_call_operand.vmem [shape: f32[1,32], index: 4, kind: input, shape index: {}]
  %s5 = inlined_call_operand.hbm [shape: f32[32,128], index: 5, kind: input, shape index: {}]
  %s6 = inlined_call_operand.vmem [shape: f32[1,128], index: 6, kind: input, shape index: {}]
  %s7 = inlined_call_operand.vmem [shape: f32[1,128], index: 7, kind: input, shape index: {}]
  %s8 = inlined_call_operand.vmem [shape: f32[1,128], index: 8, kind: input, shape index: {}]
  %s9 = inlined_call_operand.hbm [shape: f32[8,8], index: 9, kind: output, shape index: {}]
  %s10 = sld [smem:[#allocation0]]
  $region62: #{tpu_custom_call.1} parent=0
    _
  %s12 = ssub.s32 1, %s10
  %s13 = scalar_select 0, %s12, %s10
  $region1: #{tpu_custom_call.1} parent=0
    #allocation2 [shape = 'u8[4096]{0}', space=vmem, size = 0x1000, scoped, tag = 'input window, operand 0, single buffered']
    #allocation3 [shape = 's32[1]{0}', space=sflag, size = 0x4, scoped, tag = 'scoped memory for tpu_custom_call.1']
    #allocation4 [shape = 's32[1]{0}', space=sflag, size = 0x4, scoped, tag = 'scoped memory for tpu_custom_call.1']
    #allocation5 [shape = 'u8[4096]{0}', space=vmem, size = 0x1000, scoped, tag = 'input window, operand 1, single buffered']
    #allocation6 [shape = 's32[1]{0}', space=sflag, size = 0x4, scoped, tag = 'scoped memory for tpu_custom_call.1']
    #allocation7 [shape = 'u8[16384]{0}', space=vmem, size = 0x4000, scoped, tag = 'input window, operand 3, single buffered']
    #allocation8 [shape = 'u8[16384]{0}', space=vmem, size = 0x4000, scoped, tag = 'input window, operand 5, single buffered']
    #allocation9 [shape = 's32[1]{0}', space=sflag, size = 0x4, scoped, tag = 'scoped memory for tpu_custom_call.1']
    #allocation10 [shape = 'u8[4096]{0}', space=vmem, size = 0x1000, scoped, tag = 'output window, operand 0, single buffered']
    %14 = vsyncpa [#allocation3], 0
    %15 = vsyncpa [#allocation6], 0
    %16 = vsyncpa [#allocation9], 0
    %17 = vsyncpa [#allocation4], 0
    // Predicated region
    $region2: #{tpu_custom_call.1} parent=1 // pred_check
      _
    $region3: #{tpu_custom_call.1} parent=1 // pred_check_branch
      %19 = sbr.rel (0) target = $region5
    $region4: #{tpu_custom_call.1} parent=1 // pred_region
      %s21 = ssub.s32 128, 128
      %22 = vsyncadd [#allocation3], %s21
      %s24 = sshll.u32 [#allocation2], 4
      %s25 = int_to_ptr.vmem [resolvable:$true] %s24
      %27 = dma.hbm_to_vmem [thread:$0]  %s0, 128, %s25, [#allocation3]
    $region5: #{tpu_custom_call.1} parent=1 // pred_fallthru
      _
    // Predicated region
    $region6: #{tpu_custom_call.1} parent=1 // pred_check
      _
    $region7: #{tpu_custom_call.1} parent=1 // pred_check_branch
      %29 = sbr.rel (0) target = $region9
    $region8: #{tpu_custom_call.1} parent=1 // pred_region
      %s31 = ssub.s32 128, 128
      %32 = vsyncadd [#allocation6], %s31
      %s34 = sshll.u32 [#allocation5], 4
      %s35 = int_to_ptr.vmem [resolvable:$true] %s34
      %37 = dma.hbm_to_vmem [thread:$0]  %s1, 128, %s35, [#allocation6]
    $region9: #{tpu_custom_call.1} parent=1 // pred_fallthru
      _
    // Predicated region
    $region10: #{tpu_custom_call.1} parent=1 // pred_check
      _
    $region11: #{tpu_custom_call.1} parent=1 // pred_check_branch
      %39 = sbr.rel (0) target = $region13
    $region12: #{tpu_custom_call.1} parent=1 // pred_region
      _
    $region13: #{tpu_custom_call.1} parent=1 // pred_fallthru
      _
    // Predicated region
    $region14: #{tpu_custom_call.1} parent=1 // pred_check
      _
    $region15: #{tpu_custom_call.1} parent=1 // pred_check_branch
      %41 = sbr.rel (0) target = $region17
    $region16: #{tpu_custom_call.1} parent=1 // pred_region
      %s43 = ssub.s32 512, 512
      %44 = vsyncadd [#allocation6], %s43
      %s45 = sshll.u32 [#allocation7], 4
      %s46 = int_to_ptr.vmem [resolvable:$true] %s45
      %51 = dma.hbm_to_vmem [thread:$0]  %s3, 512, %s46, [#allocation6], 128, 128, 8
    $region17: #{tpu_custom_call.1} parent=1 // pred_fallthru
      _
    // Predicated region
    $region18: #{tpu_custom_call.1} parent=1 // pred_check
      _
    $region19: #{tpu_custom_call.1} parent=1 // pred_check_branch
      %53 = sbr.rel (0) target = $region21
    $region20: #{tpu_custom_call.1} parent=1 // pred_region
      _
    $region21: #{tpu_custom_call.1} parent=1 // pred_fallthru
      _
    // Predicated region
    $region22: #{tpu_custom_call.1} parent=1 // pred_check
      _
    $region23: #{tpu_custom_call.1} parent=1 // pred_check_branch
      %55 = sbr.rel (0) target = $region25
    $region24: #{tpu_custom_call.1} parent=1 // pred_region
      %s57 = ssub.s32 512, 512
      %58 = vsyncadd [#allocation9], %s57
      %s59 = sshll.u32 [#allocation8], 4
      %s60 = int_to_ptr.vmem [resolvable:$true] %s59
      %65 = dma.hbm_to_vmem [thread:$0]  %s5, 512, %s60, [#allocation9], 128, 128, 8
    $region25: #{tpu_custom_call.1} parent=1 // pred_fallthru
      _
    // Predicated region
    $region26: #{tpu_custom_call.1} parent=1 // pred_check
      _
    $region27: #{tpu_custom_call.1} parent=1 // pred_check_branch
      %67 = sbr.rel (0) target = $region29
    $region28: #{tpu_custom_call.1} parent=1 // pred_region
      _
    $region29: #{tpu_custom_call.1} parent=1 // pred_fallthru
      _
    // Predicated region
    $region30: #{tpu_custom_call.1} parent=1 // pred_check
      _
    $region31: #{tpu_custom_call.1} parent=1 // pred_check_branch
      %69 = sbr.rel (0) target = $region33
    $region32: #{tpu_custom_call.1} parent=1 // pred_region
      _
    $region33: #{tpu_custom_call.1} parent=1 // pred_fallthru
      _
    // Predicated region
    $region34: #{tpu_custom_call.1} parent=1 // pred_check
      _
    $region35: #{tpu_custom_call.1} parent=1 // pred_check_branch
      %71 = sbr.rel (0) target = $region37
    $region36: #{tpu_custom_call.1} parent=1 // pred_region
      _
    $region37: #{tpu_custom_call.1} parent=1 // pred_fallthru
      _
    // Predicated region
    $region38: #{tpu_custom_call.1} parent=1 // pred_check
      _
    $region39: #{tpu_custom_call.1} parent=1 // pred_check_branch
      %73 = sbr.rel (0) target = $region41
    $region40: #{tpu_custom_call.1} parent=1 // pred_region
      %74 = dma.done [#allocation3], 128
    $region41: #{tpu_custom_call.1} parent=1 // pred_fallthru
      _
    // Predicated region
    $region42: #{tpu_custom_call.1} parent=1 // pred_check
      _
    $region43: #{tpu_custom_call.1} parent=1 // pred_check_branch
      %76 = sbr.rel (0) target = $region45
    $region44: #{tpu_custom_call.1} parent=1 // pred_region
      %77 = dma.done [#allocation6], 128
    $region45: #{tpu_custom_call.1} parent=1 // pred_fallthru
      _
    // Predicated region
    $region46: #{tpu_custom_call.1} parent=1 // pred_check
      _
    $region47: #{tpu_custom_call.1} parent=1 // pred_check_branch
      %79 = sbr.rel (0) target = $region49
    $region48: #{tpu_custom_call.1} parent=1 // pred_region
      %80 = dma.done [#allocation6], 512
    $region49: #{tpu_custom_call.1} parent=1 // pred_fallthru
      _
    // Predicated region
    $region50: #{tpu_custom_call.1} parent=1 // pred_check
      _
    $region51: #{tpu_custom_call.1} parent=1 // pred_check_branch
      %82 = sbr.rel (0) target = $region53
    $region52: #{tpu_custom_call.1} parent=1 // pred_region
      %83 = dma.done [#allocation9], 512
    $region53: #{tpu_custom_call.1} parent=1 // pred_fallthru
      _
    %v84 = vld [vmem:[#allocation2] sm:$0xff]
    %v85 = vld [vmem:[#allocation5] sm:$0xff]
    %v86 = vld [vmem:[%s2] sm:$0x1]
    %v88 = vlaneseq
    %v89 = vshrl.u32 %v88, 7
    %v90 = vsub.s32 0, %v89
    %v91 = vrot.slane %v86, %v90
    %vm93 = vcmask 64512
    %v95 = vsel %vm93, %v84, 0
    %97 = vmatprep.subr.mxu0 0.0
    %98 = vmatpush1.msra.mxu0 %v85
    %99 = vmatprep.subr.mxu0 0.0
    %100 = vmatpush1.msra.mxu0 0.0
    %101 = vmatprep.subr.mxu0 0.0
    %102 = vmatpush1.msra.mxu0 0.0
    %103 = vmatprep.subr.mxu0 0.0
    %104 = vmatpush1.msra.mxu0 0.0
    %105 = vmatprep.subr.mxu0 0.0
    %106 = vmatpush1.msra.mxu0 0.0
    %107 = vmatprep.subr.mxu0 0.0
    %108 = vmatpush1.msra.mxu0 0.0
    %109 = vmatprep.subr.mxu0 0.0
    %110 = vmatpush1.msra.mxu0 0.0
    %111 = vmatprep.subr.mxu0 0.0
    %112 = vmatpush1.msra.mxu0 0.0
    %113 = vmatprep.subr.mxu0 0.0
    %114 = vmatpush1.msra.mxu0 0.0
    %115 = vmatprep.subr.mxu0 0.0
    %116 = vmatpush1.msra.mxu0 0.0
    %117 = vmatprep.subr.mxu0 0.0
    %118 = vmatpush1.msra.mxu0 0.0
    %119 = vmatprep.subr.mxu0 0.0
    %120 = vmatpush1.msra.mxu0 0.0
    %121 = vmatprep.subr.mxu0 0.0
    %122 = vmatpush1.msra.mxu0 0.0
    %123 = vmatprep.subr.mxu0 0.0
    %124 = vmatpush1.msra.mxu0 0.0
    %125 = vmatprep.subr.mxu0 0.0
    %126 = vmatpush1.msra.mxu0 0.0
    %127 = vmatprep.subr.mxu0 0.0
    %128 = vmatpush1.msra.mxu0 0.0
    %129 = vmatprep.subr.mxu0 0.0
    %130 = vmatpush1.msra.mxu0 0.0
    %131 = vmatprep.subr.mxu0 0.0
    %132 = vmatpush1.msra.mxu0 0.0
    %133 = vmatprep.subr.mxu0 0.0
    %134 = vmatpush1.msra.mxu0 0.0
    %135 = vmatprep.subr.mxu0 0.0
    %136 = vmatpush1.msra.mxu0 0.0
    %137 = vmatprep.subr.mxu0 0.0
    %138 = vmatpush1.msra.mxu0 0.0
    %139 = vmatprep.subr.mxu0 0.0
    %140 = vmatpush1.msra.mxu0 0.0
    %141 = vmatprep.subr.mxu0 0.0
    %142 = vmatpush1.msra.mxu0 0.0
    %143 = vmatprep.subr.mxu0 0.0
    %144 = vmatpush1.msra.mxu0 0.0
    %145 = vmatprep.subr.mxu0 0.0
    %146 = vmatpush1.msra.mxu0 0.0
    %147 = vmatprep.subr.mxu0 0.0
    %148 = vmatpush1.msra.mxu0 0.0
    %149 = vmatprep.subr.mxu0 0.0
    %150 = vmatpush1.msra.mxu0 0.0
    %151 = vmatprep.subr.mxu0 0.0
    %152 = vmatpush1.msra.mxu0 0.0
    %153 = vmatprep.subr.mxu0 0.0
    %154 = vmatpush1.msra.mxu0 0.0
    %155 = vmatprep.subr.mxu0 0.0
    %156 = vmatpush1.msra.mxu0 0.0
    %157 = vmatprep.subr.mxu0 0.0
    %158 = vmatpush1.msra.mxu0 0.0
    %159 = vmatprep.subr.mxu0 0.0
    %160 = vmatpush1.msra.mxu0 0.0
    %161 = vmatprep.mubr.f32.mxu0 0.0
    %162 = vmatmul.mubr.f32.gmra.mrb[0].mxu0 %v95
    %v163 = vpop.f32.mrb[0].mxu0
    %v164 = vadd.f32 %v91, %v163
    %v165 = vpop.f32.mrb[0].mxu0
    %166 = vdwg.mxu0
    %v167 = vmax.f32 %v164, 0.0
    %v168 = vld [vmem:[#allocation7] sm:$0xff]
    %v169 = vld [vmem:[#allocation7 + $0x8] sm:$0xff]
    %v170 = vld [vmem:[#allocation7 + $0x10] sm:$0xff]
    %v171 = vld [vmem:[#allocation7 + $0x18] sm:$0xff]
    %v172 = vld [vmem:[%s4] sm:$0x1]
    %v174 = vlaneseq
    %v175 = vshrl.u32 %v174, 7
    %v176 = vsub.s32 0, %v175
    %v177 = vrot.slane %v172, %v176
    %vm179 = vcmask 261120
    %v181 = vsel %vm179, %v167, 0
    %183 = vmatprep.subr.mxu0 0.0
    %184 = vmatpush1.msra.mxu0 %v168
    %185 = vmatprep.subr.mxu0 0.0
    %186 = vmatpush1.msra.mxu0 %v169
    %187 = vmatprep.subr.mxu0 0.0
    %188 = vmatpush1.msra.mxu0 %v170
    %189 = vmatprep.subr.mxu0 0.0
    %190 = vmatpush1.msra.mxu0 %v171
    %191 = vmatprep.subr.mxu0 0.0
    %192 = vmatpush1.msra.mxu0 0.0
    %193 = vmatprep.subr.mxu0 0.0
    %194 = vmatpush1.msra.mxu0 0.0
    %195 = vmatprep.subr.mxu0 0.0
    %196 = vmatpush1.msra.mxu0 0.0
    %197 = vmatprep.subr.mxu0 0.0
    %198 = vmatpush1.msra.mxu0 0.0
    %199 = vmatprep.subr.mxu0 0.0
    %200 = vmatpush1.msra.mxu0 0.0
    %201 = vmatprep.subr.mxu0 0.0
    %202 = vmatpush1.msra.mxu0 0.0
    %203 = vmatprep.subr.mxu0 0.0
    %204 = vmatpush1.msra.mxu0 0.0
    %205 = vmatprep.subr.mxu0 0.0
    %206 = vmatpush1.msra.mxu0 0.0
    %207 = vmatprep.subr.mxu0 0.0
    %208 = vmatpush1.msra.mxu0 0.0
    %209 = vmatprep.subr.mxu0 0.0
    %210 = vmatpush1.msra.mxu0 0.0
    %211 = vmatprep.subr.mxu0 0.0
    %212 = vmatpush1.msra.mxu0 0.0
    %213 = vmatprep.subr.mxu0 0.0
    %214 = vmatpush1.msra.mxu0 0.0
    %215 = vmatprep.subr.mxu0 0.0
    %216 = vmatpush1.msra.mxu0 0.0
    %217 = vmatprep.subr.mxu0 0.0
    %218 = vmatpush1.msra.mxu0 0.0
    %219 = vmatprep.subr.mxu0 0.0
    %220 = vmatpush1.msra.mxu0 0.0
    %221 = vmatprep.subr.mxu0 0.0
    %222 = vmatpush1.msra.mxu0 0.0
    %223 = vmatprep.subr.mxu0 0.0
    %224 = vmatpush1.msra.mxu0 0.0
    %225 = vmatprep.subr.mxu0 0.0
    %226 = vmatpush1.msra.mxu0 0.0
    %227 = vmatprep.subr.mxu0 0.0
    %228 = vmatpush1.msra.mxu0 0.0
    %229 = vmatprep.subr.mxu0 0.0
    %230 = vmatpush1.msra.mxu0 0.0
    %231 = vmatprep.subr.mxu0 0.0
    %232 = vmatpush1.msra.mxu0 0.0
    %233 = vmatprep.subr.mxu0 0.0
    %234 = vmatpush1.msra.mxu0 0.0
    %235 = vmatprep.subr.mxu0 0.0
    %236 = vmatpush1.msra.mxu0 0.0
    %237 = vmatprep.subr.mxu0 0.0
    %238 = vmatpush1.msra.mxu0 0.0
    %239 = vmatprep.subr.mxu0 0.0
    %240 = vmatpush1.msra.mxu0 0.0
    %241 = vmatprep.subr.mxu0 0.0
    %242 = vmatpush1.msra.mxu0 0.0
    %243 = vmatprep.subr.mxu0 0.0
    %244 = vmatpush1.msra.mxu0 0.0
    %245 = vmatprep.subr.mxu0 0.0
    %246 = vmatpush1.msra.mxu0 0.0
    %247 = vmatprep.mubr.f32.mxu0 0.0
    %248 = vmatmul.mubr.f32.gmra.mrb[0].mxu0 %v181
    %v249 = vpop.f32.mrb[0].mxu0
    %v250 = vadd.f32 %v177, %v249
    %v251 = vpop.f32.mrb[0].mxu0
    %252 = vdwg.mxu0
    %v253 = vmax.f32 %v250, 0.0
    %v254 = vld [vmem:[#allocation8] sm:$0xff]
    %v255 = vld [vmem:[#allocation8 + $0x8] sm:$0xff]
    %v256 = vld [vmem:[#allocation8 + $0x10] sm:$0xff]
    %v257 = vld [vmem:[#allocation8 + $0x18] sm:$0xff]
    %v258 = vld [vmem:[%s6] sm:$0x1]
    %v260 = vlaneseq
    %v261 = vshrl.u32 %v260, 7
    %v262 = vsub.s32 0, %v261
    %v263 = vrot.slane %v258, %v262
    %v266 = vsel %vm179, %v253, 0
    %268 = vmatprep.subr.mxu0 0.0
    %269 = vmatpush1.msra.mxu0 %v254
    %270 = vmatprep.subr.mxu0 0.0
    %271 = vmatpush1.msra.mxu0 %v255
    %272 = vmatprep.subr.mxu0 0.0
    %273 = vmatpush1.msra.mxu0 %v256
    %274 = vmatprep.subr.mxu0 0.0
    %275 = vmatpush1.msra.mxu0 %v257
    %276 = vmatprep.subr.mxu0 0.0
    %277 = vmatpush1.msra.mxu0 0.0
    %278 = vmatprep.subr.mxu0 0.0
    %279 = vmatpush1.msra.mxu0 0.0
    %280 = vmatprep.subr.mxu0 0.0
    %281 = vmatpush1.msra.mxu0 0.0
    %282 = vmatprep.subr.mxu0 0.0
    %283 = vmatpush1.msra.mxu0 0.0
    %284 = vmatprep.subr.mxu0 0.0
    %285 = vmatpush1.msra.mxu0 0.0
    %286 = vmatprep.subr.mxu0 0.0
    %287 = vmatpush1.msra.mxu0 0.0
    %288 = vmatprep.subr.mxu0 0.0
    %289 = vmatpush1.msra.mxu0 0.0
    %290 = vmatprep.subr.mxu0 0.0
    %291 = vmatpush1.msra.mxu0 0.0
    %292 = vmatprep.subr.mxu0 0.0
    %293 = vmatpush1.msra.mxu0 0.0
    %294 = vmatprep.subr.mxu0 0.0
    %295 = vmatpush1.msra.mxu0 0.0
    %296 = vmatprep.subr.mxu0 0.0
    %297 = vmatpush1.msra.mxu0 0.0
    %298 = vmatprep.subr.mxu0 0.0
    %299 = vmatpush1.msra.mxu0 0.0
    %300 = vmatprep.subr.mxu0 0.0
    %301 = vmatpush1.msra.mxu0 0.0
    %302 = vmatprep.subr.mxu0 0.0
    %303 = vmatpush1.msra.mxu0 0.0
    %304 = vmatprep.subr.mxu0 0.0
    %305 = vmatpush1.msra.mxu0 0.0
    %306 = vmatprep.subr.mxu0 0.0
    %307 = vmatpush1.msra.mxu0 0.0
    %308 = vmatprep.subr.mxu0 0.0
    %309 = vmatpush1.msra.mxu0 0.0
    %310 = vmatprep.subr.mxu0 0.0
    %311 = vmatpush1.msra.mxu0 0.0
    %312 = vmatprep.subr.mxu0 0.0
    %313 = vmatpush1.msra.mxu0 0.0
    %314 = vmatprep.subr.mxu0 0.0
    %315 = vmatpush1.msra.mxu0 0.0
    %316 = vmatprep.subr.mxu0 0.0
    %317 = vmatpush1.msra.mxu0 0.0
    %318 = vmatprep.subr.mxu0 0.0
    %319 = vmatpush1.msra.mxu0 0.0
    %320 = vmatprep.subr.mxu0 0.0
    %321 = vmatpush1.msra.mxu0 0.0
    %322 = vmatprep.subr.mxu0 0.0
    %323 = vmatpush1.msra.mxu0 0.0
    %324 = vmatprep.subr.mxu0 0.0
    %325 = vmatpush1.msra.mxu0 0.0
    %326 = vmatprep.subr.mxu0 0.0
    %327 = vmatpush1.msra.mxu0 0.0
    %328 = vmatprep.subr.mxu0 0.0
    %329 = vmatpush1.msra.mxu0 0.0
    %330 = vmatprep.subr.mxu0 0.0
    %331 = vmatpush1.msra.mxu0 0.0
    %332 = vmatprep.mubr.f32.mxu0 0.0
    %333 = vmatmul.mubr.f32.gmra.mrb[0].mxu0 %v266
    %v334 = vpop.f32.mrb[0].mxu0
    %v335 = vadd.f32 %v263, %v334
    %v336 = vpop.f32.mrb[0].mxu0
    %337 = vdwg.mxu0
    %v338 = vld [vmem:[%s7] sm:$0x1]
    %v340 = vlaneseq
    %v341 = vshrl.u32 %v340, 7
    %v342 = vsub.s32 0, %v341
    %v343 = vrot.slane %v338, %v342
    %v345 = vmax.f32 %v335, %v343
    %v346 = vld [vmem:[%s8] sm:$0x1]
    %v348 = vlaneseq
    %v349 = vshrl.u32 %v348, 7
    %v350 = vsub.s32 0, %v349
    %v351 = vrot.slane %v346, %v350
    %v353 = vmin.f32 %v345, %v351
    %354 = vst.msk [vmem:[#allocation10] sm:$0xff] %vm93, %v353
    // Predicated region
    $region54: #{tpu_custom_call.1} parent=1 // pred_check
      _
    $region55: #{tpu_custom_call.1} parent=1 // pred_check_branch
      %356 = sbr.rel (0) target = $region57
    $region56: #{tpu_custom_call.1} parent=1 // pred_region
      %s358 = ssub.s32 128, 128
      %359 = vsyncadd [#allocation4], %s358
      %s361 = sshll.u32 [#allocation10], 4
      %s362 = int_to_ptr.vmem [resolvable:$true] %s361
      %364 = dma.vmem_to_hbm [thread:$0]  %s362, 128, %s9, [#allocation4]
    $region57: #{tpu_custom_call.1} parent=1 // pred_fallthru
      _
    // Predicated region
    $region58: #{tpu_custom_call.1} parent=1 // pred_check
      _
    $region59: #{tpu_custom_call.1} parent=1 // pred_check_branch
      %366 = sbr.rel (0) target = $region61
    $region60: #{tpu_custom_call.1} parent=1 // pred_region
      %367 = dma.done [#allocation4], 128
    $region61: #{tpu_custom_call.1} parent=1 // pred_fallthru
      _
    %368 = vsyncpa [#allocation3], 1
    %369 = vsyncpa [#allocation6], 1
    %370 = vsyncpa [#allocation9], 1
    %371 = vsyncpa [#allocation4], 1

</llo_original>
